<compile_context>
chip_gen: v7x
topology: tpu7x:2x2x1
jax: 0.10.0
libtpu: 0.0.40
codegen_flags: <defaults>
</compile_context>

<pallas_src>
import functools

import jax
import jax.numpy as jnp
from jax import lax
from jax.experimental import pallas as pl
from jax.experimental.pallas import tpu as pltpu

DTYPE = jnp.bfloat16      # torch.half -> bfloat16 on TPU
GROUPSIZE = 64            # only groupsize 64 is supported (as in the torch module)
PACK = 8                  # 3-bit codes per int32 word (packed along K)


def _round_up(x, m):
    return (x + m - 1) // m * m


def _pick_tile(dim, candidates):
    """Largest candidate that divides `dim`, else the full dim (full-extent blocks are
    always legal w.r.t. the (8, 128) rule)."""
    for c in candidates:
        if c <= dim and dim % c == 0:
            return c
    return dim


def _dequant_tile(bq_ref, s_ref, z_ref):
    """Unpack a (tk//8, tn) block of packed 3-bit codes into (tk, tn) bf16 weights."""
    ng, tn = s_ref.shape                               # ng = tk // GROUPSIZE
    # (tk//8, tn) packed words -> (ng, 8 words, tn): pure sublane split, lanes stay last.
    kq = bq_ref[...].reshape(ng, GROUPSIZE // PACK, tn)
    shifts = 3 * lax.broadcasted_iota(jnp.int32, (1, 1, PACK, 1), 2)
    q = (kq[:, :, None, :] >> shifts) & 0x7            # (ng, 8, 8, tn) codes 0..7

    # int32 -> f32 -> bf16 is exact for 0..7; scale / zero applied in bf16 so the VPU
    # runs packed 2-per-lane on v6e/v7x (v5e falls back to f32 emulation -- still correct).
    qb = q.astype(jnp.float32).astype(jnp.bfloat16)
    s = s_ref[...][:, None, None, :]                   # (ng, 1, 1, tn) sublane broadcast
    z = z_ref[...][:, None, None, :]
    w = qb * s + z
    return w.reshape(ng * GROUPSIZE, tn)               # sublane-merge reshape -> (tk, tn)


def _qlinear3_kernel(a_ref, bq_ref, s_ref, z_ref, o_ref, acc_ref):
    """Single-pass variant (one row-tile of A): dequantize + matmul per (i, j, k) block."""
    @pl.when(pl.program_id(2) == 0)
    def _():
        acc_ref[...] = jnp.zeros_like(acc_ref)

    w = _dequant_tile(bq_ref, s_ref, z_ref)
    acc_ref[...] += jnp.dot(a_ref[...], w, preferred_element_type=jnp.float32)

    @pl.when(pl.program_id(2) == pl.num_programs(2) - 1)
    def _():
        o_ref[...] = acc_ref[...].astype(o_ref.dtype)


def _qlinear3_kernel_cached(a_ref, bq_ref, s_ref, z_ref, o_ref, acc_ref, wc_ref):
    """Multi row-tile variant: grid is (j, i, k); dequantize each (k, j) weight tile once
    (at i == 0) into a VMEM cache and reuse it for every later row-tile i."""
    i = pl.program_id(1)
    k = pl.program_id(2)

    @pl.when(k == 0)
    def _():
        acc_ref[...] = jnp.zeros_like(acc_ref)

    @pl.when(i == 0)
    def _():
        wc_ref[k] = _dequant_tile(bq_ref, s_ref, z_ref)

    acc_ref[...] += jnp.dot(a_ref[...], wc_ref[k], preferred_element_type=jnp.float32)

    @pl.when(k == pl.num_programs(2) - 1)
    def _():
        o_ref[...] = acc_ref[...].astype(o_ref.dtype)


@functools.partial(jax.jit, static_argnames=("tm", "tn", "tk", "cache_budget_bytes"))
def qlinear_3bit_with_zero(A, Bq, s, z, *, tm=256, tn=None, tk=None,
                           cache_budget_bytes=12 * 1024 * 1024):
    """C = A @ (Q * s + z), with Q packed 3-bit in Bq (see layout comment above)."""
    *lead, K = A.shape
    N = s.shape[1]
    assert K % GROUPSIZE == 0
    assert s.shape == (K // GROUPSIZE, N) and z.shape == (K // GROUPSIZE, N)
    assert Bq.shape == (K // PACK, N)

    # Shape-adaptive tiles (static at trace time).  tk multiples of 512 keep the s/z
    # block sublane count a multiple of 8; otherwise fall back to the full dimension.
    if tk is None:
        tk = _pick_tile(K, (1024, 512))
    if tn is None:
        tn = _pick_tile(N, (512, 256, 128))
    tk = min(tk, K)
    tn = min(tn, N)
    assert K % tk == 0 and N % tn == 0
    assert tk % GROUPSIZE == 0 and tk % PACK == 0
    assert (tk % (8 * GROUPSIZE) == 0) or (tk == K)

    A2 = A.reshape(-1, K)
    M = A2.shape[0]

    # Full-height MXU tiles for prefill; clamp to a 16-row multiple covering M for decode
    # so small batches don't pay for a 256-row pad or masked stores.
    tm_eff = min(tm, _round_up(max(M, 1), 16))
    Mp = _round_up(M, tm_eff)
    if Mp != M:
        # TODO(synk): for large ragged M this is a full HBM pad-copy of A; a masked tail
        # block would avoid it.
        A2 = jnp.pad(A2, ((0, Mp - M), (0, 0)))

    n_i, n_j, n_k = Mp // tm_eff, N // tn, K // tk
    # Cache the dequantized weights across row-tiles when there is more than one and the
    # cache (K * tn bf16) fits comfortably in VMEM next to the pipeline buffers.
    use_cache = (n_i > 1) and (K * tn * 2 <= cache_budget_bytes)

    if use_cache:
        grid = (n_j, n_i, n_k)
        in_specs = [
            pl.BlockSpec((tm_eff, tk), lambda j, i, k: (i, k)),
            # Packed weights are only read on the first row-tile pass; afterwards park the
            # block index so consecutive steps see an unchanged index and Pallas skips the
            # (large) redundant HBM refetch.
            pl.BlockSpec((tk // PACK, tn),
                         lambda j, i, k: (jnp.where(i == 0, k, 0), j)),
            pl.BlockSpec((tk // GROUPSIZE, tn), lambda j, i, k: (k, j)),
            pl.BlockSpec((tk // GROUPSIZE, tn), lambda j, i, k: (k, j)),
        ]
        out_specs = pl.BlockSpec((tm_eff, tn), lambda j, i, k: (i, j))
        scratch = [pltpu.VMEM((tm_eff, tn), jnp.float32),
                   pltpu.VMEM((n_k, tk, tn), jnp.bfloat16)]
        kernel = _qlinear3_kernel_cached
        dims = ("parallel", "arbitrary", "arbitrary")
    else:
        grid = (n_i, n_j, n_k)
        in_specs = [
            pl.BlockSpec((tm_eff, tk), lambda i, j, k: (i, k)),
            pl.BlockSpec((tk // PACK, tn), lambda i, j, k: (k, j)),
            pl.BlockSpec((tk // GROUPSIZE, tn), lambda i, j, k: (k, j)),
            pl.BlockSpec((tk // GROUPSIZE, tn), lambda i, j, k: (k, j)),
        ]
        out_specs = pl.BlockSpec((tm_eff, tn), lambda i, j, k: (i, j))
        scratch = [pltpu.VMEM((tm_eff, tn), jnp.float32)]
        kernel = _qlinear3_kernel
        dims = ("parallel", "parallel", "arbitrary")

    out = pl.pallas_call(
        kernel,
        out_shape=jax.ShapeDtypeStruct((Mp, N), A.dtype),
        grid_spec=pltpu.PrefetchScalarGridSpec(
            num_scalar_prefetch=0,
            grid=grid,
            in_specs=in_specs,
            out_specs=out_specs,
            scratch_shapes=scratch,
        ),
        compiler_params=pltpu.CompilerParams(
            dimension_semantics=dims,
            vmem_limit_bytes=48 * 1024 * 1024,   # safe on v7x (64 MiB physical) and v5e/v6e
        ),
    )(A2, Bq, s, z)

    return out[:M].reshape(*lead, N)


def pack_3bit(Q):
    """Pack int codes (K, N) in [0,7] into (K//8, N) int32, 8 codes per word along K."""
    K, N = Q.shape
    Qr = Q.reshape(K // PACK, PACK, N).astype(jnp.int32)
    shifts = (3 * jnp.arange(PACK, dtype=jnp.int32))[None, :, None]
    return jnp.sum(Qr << shifts, axis=1).astype(jnp.int32)


# TODO(synk): the `workspace` global-lock buffer of the Marlin CUDA kernel has no TPU
# equivalent (it coordinates CUDA thread-blocks) and is intentionally omitted.
# TODO(synk): packing could be densified to 32 codes / 3 int32 words (uses all 32 bits)
# for ~25% less quantized-weight HBM traffic at the cost of a cross-word extract.
# TODO(synk): the zero-point term could be folded into a tiny (M, K/64) @ (K/64, N)
# matmul (A group-sums against z) to drop the per-weight bf16 add; skipped to keep the
# kernel signature identical to the module's buffers.

if __name__ == "__main__":
    key = jax.random.PRNGKey(0)
    k1, k2, k3, k4 = jax.random.split(key, 4)

    # infeatures / outfeatures consistent with the module's constraints
    # (K % 64 == 0, N % 64 == 0, 256 | K or 256 | N, groupsize = 64).
    K, N = 256, 256

    Q = jax.random.randint(k2, (K, N), 0, 8, dtype=jnp.int32)                  # 3-bit codes
    s = (0.01 + 0.01 * jax.random.uniform(k3, (K // GROUPSIZE, N))).astype(DTYPE)
    z = (0.05 * jax.random.normal(k4, (K // GROUPSIZE, N))).astype(DTYPE)
    Bq = pack_3bit(Q)

    # Pure-JAX dequantized weights for reference.
    s_e = jnp.repeat(s.astype(jnp.float32), GROUPSIZE, axis=0)
    z_e = jnp.repeat(z.astype(jnp.float32), GROUPSIZE, axis=0)
    W = Q.astype(jnp.float32) * s_e + z_e

    # Case 1: decode-style shapes -> single row-tile (non-cached) path.
    A = jax.random.normal(k1, (2, 4, K), dtype=jnp.float32).astype(DTYPE)
    C = jax.block_until_ready(qlinear_3bit_with_zero(A, Bq, s, z))
    C_ref = jnp.einsum("bsk,kn->bsn", A.astype(jnp.float32), W)
    assert C.shape == (2, 4, N)
    assert C.dtype == DTYPE
    err = float(jnp.max(jnp.abs(C.astype(jnp.float32) - C_ref)))
    assert err < 0.1, f"max abs error too large (simple path): {err}"

    # Case 2: multiple row-tiles (tm=16, M=32) -> exercises the VMEM weight-cache path.
    A2 = jax.random.normal(k1, (2, 16, K), dtype=jnp.float32).astype(DTYPE)
    C2 = jax.block_until_ready(qlinear_3bit_with_zero(A2, Bq, s, z, tm=16))
    C2_ref = jnp.einsum("bsk,kn->bsn", A2.astype(jnp.float32), W)
    assert C2.shape == (2, 16, N)
    assert C2.dtype == DTYPE
    err2 = float(jnp.max(jnp.abs(C2.astype(jnp.float32) - C2_ref)))
    assert err2 < 0.1, f"max abs error too large (cached path): {err2}"

    print("KERNEL_OK")
</pallas_src>

<mosaic_0001>
module attributes {stable_mosaic.version = 11 : i64} {
  func.func @_qlinear3_kernel(%arg0: i32, %arg1: i32, %arg2: i32, %arg3: memref<16x256xbf16, #tpu.memory_space<vmem>>, %arg4: memref<32x256xi32, #tpu.memory_space<vmem>>, %arg5: memref<4x256xbf16, #tpu.memory_space<vmem>>, %arg6: memref<4x256xbf16, #tpu.memory_space<vmem>>, %arg7: memref<16x256xbf16, #tpu.memory_space<vmem>>, %arg8: memref<16x256xf32, #tpu.memory_space<vmem>>) attributes {dimension_semantics = [#tpu.dimension_semantics<parallel>, #tpu.dimension_semantics<parallel>, #tpu.dimension_semantics<arbitrary>], iteration_bounds = array<i64: 1, 1, 1>, scalar_prefetch = 0 : i64, scratch_operands = 1 : i64, tpu.core_type = #tpu.core_type<tc>, window_params = [{transform_indices = @transform_0, window_bounds = array<i64: 16, 256>}, {transform_indices = @transform_1, window_bounds = array<i64: 32, 256>}, {transform_indices = @transform_2, window_bounds = array<i64: 4, 256>}, {transform_indices = @transform_3, window_bounds = array<i64: 4, 256>}, {transform_indices = @transform_4, window_bounds = array<i64: 16, 256>}]} {
    %c0_i32 = arith.constant 0 : i32
    %0 = arith.cmpi eq, %arg2, %c0_i32 : i32
    %1 = arith.extui %0 : i1 to i32
    %c0_i32_0 = arith.constant 0 : i32
    %2 = arith.cmpi ne, %1, %c0_i32_0 : i32
    scf.if %2 {
      %cst_14 = arith.constant 0.000000e+00 : f32
      %33 = vector.broadcast %cst_14 : f32 to vector<16x256xf32>
      %c0_15 = arith.constant 0 : index
      %c0_16 = arith.constant 0 : index
      %34 = vector.load %arg8[%c0_15, %c0_16] : memref<16x256xf32, #tpu.memory_space<vmem>>, vector<16x256xf32>
      tpu.vector_store %arg8[%c0_15, %c0_16], %33 {strides = array<i32>} : memref<16x256xf32, #tpu.memory_space<vmem>>, vector<16x256xf32>,
    } else {
    }
    %c0 = arith.constant 0 : index
    %c0_1 = arith.constant 0 : index
    %3 = vector.load %arg4[%c0, %c0_1] : memref<32x256xi32, #tpu.memory_space<vmem>>, vector<32x256xi32>
    %4 = vector.shape_cast %3 : vector<32x256xi32> to vector<4x8x256xi32>
    %5 = tpu.iota {dimensions = array<i32: 2>} : vector<1x1x8x1xi32>
    %c3_i32 = arith.constant 3 : i32
    %6 = vector.broadcast %c3_i32 : i32 to vector<1x1x8x1xi32>
    %7 = arith.muli %6, %5 : vector<1x1x8x1xi32>
    %8 = vector.shape_cast %4 : vector<4x8x256xi32> to vector<4x8x1x256xi32>
    %9 = vector.broadcast %8 : vector<4x8x1x256xi32> to vector<4x8x8x256xi32>
    %10 = vector.broadcast %7 : vector<1x1x8x1xi32> to vector<4x8x8x256xi32>
    %11 = arith.shrsi %9, %10 : vector<4x8x8x256xi32>
    %c7_i32 = arith.constant 7 : i32
    %12 = vector.broadcast %c7_i32 : i32 to vector<4x8x8x256xi32>
    %13 = arith.andi %11, %12 : vector<4x8x8x256xi32>
    %14 = arith.sitofp %13 : vector<4x8x8x256xi32> to vector<4x8x8x256xf32>
    %15 = arith.truncf %14 : vector<4x8x8x256xf32> to vector<4x8x8x256xbf16>
    %c0_2 = arith.constant 0 : index
    %c0_3 = arith.constant 0 : index
    %16 = vector.load %arg5[%c0_2, %c0_3] : memref<4x256xbf16, #tpu.memory_space<vmem>>, vector<4x256xbf16>
    %17 = vector.shape_cast %16 : vector<4x256xbf16> to vector<4x1x1x256xbf16>
    %c0_4 = arith.constant 0 : index
    %c0_5 = arith.constant 0 : index
    %18 = vector.load %arg6[%c0_4, %c0_5] : memref<4x256xbf16, #tpu.memory_space<vmem>>, vector<4x256xbf16>
    %19 = vector.shape_cast %18 : vector<4x256xbf16> to vector<4x1x1x256xbf16>
    %20 = vector.broadcast %17 : vector<4x1x1x256xbf16> to vector<4x8x8x256xbf16>
    %21 = arith.mulf %15, %20 : vector<4x8x8x256xbf16>
    %22 = vector.broadcast %19 : vector<4x1x1x256xbf16> to vector<4x8x8x256xbf16>
    %23 = arith.addf %21, %22 : vector<4x8x8x256xbf16>
    %24 = vector.shape_cast %23 : vector<4x8x8x256xbf16> to vector<256x256xbf16>
    %c0_6 = arith.constant 0 : index
    %c0_7 = arith.constant 0 : index
    %25 = vector.load %arg8[%c0_6, %c0_7] : memref<16x256xf32, #tpu.memory_space<vmem>>, vector<16x256xf32>
    %c0_8 = arith.constant 0 : index
    %c0_9 = arith.constant 0 : index
    %26 = vector.load %arg3[%c0_8, %c0_9] : memref<16x256xbf16, #tpu.memory_space<vmem>>, vector<16x256xbf16>
    %cst = arith.constant dense<0.000000e+00> : vector<16x256xf32>
    %27 = tpu.matmul %26, %24, %cst {dimension_numbers = #tpu.dot_dimension_numbers<[1], [0], [0], [1], [0, 0, 1, 1], [], []>} : vector<16x256xbf16>, vector<256x256xbf16>, vector<16x256xf32> -> vector<16x256xf32>
    %28 = arith.addf %25, %27 : vector<16x256xf32>
    %c0_10 = arith.constant 0 : index
    %c0_11 = arith.constant 0 : index
    %29 = vector.load %arg8[%c0_10, %c0_11] : memref<16x256xf32, #tpu.memory_space<vmem>>, vector<16x256xf32>
    tpu.vector_store %arg8[%c0_10, %c0_11], %28 {strides = array<i32>} : memref<16x256xf32, #tpu.memory_space<vmem>>, vector<16x256xf32>,
    %c0_i32_12 = arith.constant 0 : i32
    %30 = arith.cmpi eq, %arg2, %c0_i32_12 : i32
    %31 = arith.extui %30 : i1 to i32
    %c0_i32_13 = arith.constant 0 : i32
    %32 = arith.cmpi ne, %31, %c0_i32_13 : i32
    scf.if %32 {
      %c0_14 = arith.constant 0 : index
      %c0_15 = arith.constant 0 : index
      %33 = vector.load %arg8[%c0_14, %c0_15] : memref<16x256xf32, #tpu.memory_space<vmem>>, vector<16x256xf32>
      %34 = arith.truncf %33 : vector<16x256xf32> to vector<16x256xbf16>
      %c0_16 = arith.constant 0 : index
      %c0_17 = arith.constant 0 : index
      %35 = vector.load %arg7[%c0_16, %c0_17] : memref<16x256xbf16, #tpu.memory_space<vmem>>, vector<16x256xbf16>
      tpu.vector_store %arg7[%c0_16, %c0_17], %34 {strides = array<i32>} : memref<16x256xbf16, #tpu.memory_space<vmem>>, vector<16x256xbf16>,
    } else {
    }
    return
  }
  func.func @transform_0(%arg0: i32, %arg1: i32, %arg2: i32) -> (i32, i32) {
    %c0_i32 = arith.constant 0 : i32
    return %arg0, %arg2 : i32, i32
  }
  func.func @transform_1(%arg0: i32, %arg1: i32, %arg2: i32) -> (i32, i32) {
    %c0_i32 = arith.constant 0 : i32
    return %arg2, %arg1 : i32, i32
  }
  func.func @transform_2(%arg0: i32, %arg1: i32, %arg2: i32) -> (i32, i32) {
    %c0_i32 = arith.constant 0 : i32
    return %arg2, %arg1 : i32, i32
  }
  func.func @transform_3(%arg0: i32, %arg1: i32, %arg2: i32) -> (i32, i32) {
    %c0_i32 = arith.constant 0 : i32
    return %arg2, %arg1 : i32, i32
  }
  func.func @transform_4(%arg0: i32, %arg1: i32, %arg2: i32) -> (i32, i32) {
    %c0_i32 = arith.constant 0 : i32
    return %arg0, %arg1 : i32, i32
  }
}

</mosaic_0001>

<llo_original>
// kernel: qlinear_3bit_with_zero.1
$region0: #{qlinear_3bit_with_zero.1}
  #allocation0 [shape = 'u32[]', space=smem, size = 0x4, offset = 0x4, fixed_abs, tag = 'smem constant byte address 0x4 - core index']
  #allocation1 [shape = 'u32[144,128]{1,0:T(1,128)}', space=vmem, size = 0x12000, scoped, tag = 'internal scratch']
  #allocation2 [shape = 'f32[16,256]{1,0:T(8,128)}', space=vmem, size = 0x4000, scoped, tag = 'scratch operand']
  %s0 = inlined_call_operand.vmem [shape: bf16[16,256], index: 0, kind: input, shape index: {}]
  %s1 = inlined_call_operand.hbm [shape: s32[32,256], index: 1, kind: input, shape index: {}]
  %s2 = inlined_call_operand.vmem [shape: bf16[4,256], index: 2, kind: input, shape index: {}]
  %s3 = inlined_call_operand.vmem [shape: bf16[4,256], index: 3, kind: input, shape index: {}]
  %s4 = inlined_call_operand.vmem [shape: bf16[16,256], index: 4, kind: output, shape index: {}]
  %s5 = sld [smem:[#allocation0]]
  $region38: #{qlinear_3bit_with_zero.1} parent=0
    _
  %s7 = ssub.s32 1, %s5
  %s8 = scalar_select 0, %s7, %s5
  $region1: #{qlinear_3bit_with_zero.1} parent=0
    #allocation3 [shape = 'u8[32768]{0}', space=vmem, size = 0x8000, scoped, tag = 'input window, operand 1, single buffered']
    #allocation4 [shape = 's32[1]{0}', space=sflag, size = 0x4, scoped, tag = 'scoped memory for qlinear_3bit_with_zero.1']
    %9 = vsyncpa [#allocation4], 0
    // Predicated region
    $region2: #{qlinear_3bit_with_zero.1} parent=1 // pred_check
      _
    $region3: #{qlinear_3bit_with_zero.1} parent=1 // pred_check_branch
      %11 = sbr.rel (0) target = $region5
    $region4: #{qlinear_3bit_with_zero.1} parent=1 // pred_region
      _
    $region5: #{qlinear_3bit_with_zero.1} parent=1 // pred_fallthru
      _
    // Predicated region
    $region6: #{qlinear_3bit_with_zero.1} parent=1 // pred_check
      _
    $region7: #{qlinear_3bit_with_zero.1} parent=1 // pred_check_branch
      %13 = sbr.rel (0) target = $region9
    $region8: #{qlinear_3bit_with_zero.1} parent=1 // pred_region
      %s15 = ssub.s32 1024, 1024
      %16 = vsyncadd [#allocation4], %s15
      %s17 = sshll.u32 [#allocation3], 4
      %s18 = int_to_ptr.vmem [resolvable:$true] %s17
      %23 = dma.hbm_to_vmem [thread:$0]  %s1, 1024, %s18, [#allocation4], 256, 256, 16
    $region9: #{qlinear_3bit_with_zero.1} parent=1 // pred_fallthru
      _
    // Predicated region
    $region10: #{qlinear_3bit_with_zero.1} parent=1 // pred_check
      _
    $region11: #{qlinear_3bit_with_zero.1} parent=1 // pred_check_branch
      %25 = sbr.rel (0) target = $region13
    $region12: #{qlinear_3bit_with_zero.1} parent=1 // pred_region
      _
    $region13: #{qlinear_3bit_with_zero.1} parent=1 // pred_fallthru
      _
    // Predicated region
    $region14: #{qlinear_3bit_with_zero.1} parent=1 // pred_check
      _
    $region15: #{qlinear_3bit_with_zero.1} parent=1 // pred_check_branch
      %27 = sbr.rel (0) target = $region17
    $region16: #{qlinear_3bit_with_zero.1} parent=1 // pred_region
      _
    $region17: #{qlinear_3bit_with_zero.1} parent=1 // pred_fallthru
      _
    // Predicated region
    $region18: #{qlinear_3bit_with_zero.1} parent=1 // pred_check
      _
    $region19: #{qlinear_3bit_with_zero.1} parent=1 // pred_check_branch
      %29 = sbr.rel (0) target = $region21
    $region20: #{qlinear_3bit_with_zero.1} parent=1 // pred_region
      %30 = dma.done [#allocation4], 1024
    $region21: #{qlinear_3bit_with_zero.1} parent=1 // pred_fallthru
      _
    %p31 = scmp.eq.s32.totalorder 0, 0
    // Predicated region
    $region22: #{qlinear_3bit_with_zero.1} parent=1 // pred_check
      %p32 = pneg %p31
    $region23: #{qlinear_3bit_with_zero.1} parent=1 // pred_check_branch
      %34 = sbr.rel (%p32) target = $region25
    $region24: #{qlinear_3bit_with_zero.1} parent=1 // pred_region
      %35 = vst [vmem:[#allocation2] sm:$0xff] 0.0
      %36 = vst [vmem:[#allocation2 + $0x8] sm:$0xff] 0.0
      %37 = vst [vmem:[#allocation2 + $0x10] sm:$0xff] 0.0
      %38 = vst [vmem:[#allocation2 + $0x18] sm:$0xff] 0.0
    $region25: #{qlinear_3bit_with_zero.1} parent=1 // pred_fallthru
      _
    %v39 = vld [vmem:[#allocation3] sm:$0xff]
    %v40 = vld [vmem:[#allocation3 + $0x8] sm:$0xff]
    %v41 = vld [vmem:[#allocation3 + $0x10] sm:$0xff]
    %v42 = vld [vmem:[#allocation3 + $0x18] sm:$0xff]
    %v43 = vld [vmem:[#allocation3 + $0x20] sm:$0xff]
    %v44 = vld [vmem:[#allocation3 + $0x28] sm:$0xff]
    %v45 = vld [vmem:[#allocation3 + $0x30] sm:$0xff]
    %v46 = vld [vmem:[#allocation3 + $0x38] sm:$0xff]
    %v47 = vlaneseq
    %v48 = vshrl.u32 %v47, 7
    %v49 = vmul.u32 %v48, 3
    %v50 = vcombine.low %v39, %v40
    %v51 = vcombine.high %v39, %v40
    %v53 = vunpack.c.l.s4 1966171168
    %v54 = vunpack.c.0.s8 %v53
    %v55 = vlaneseq
    %v56 = vshrl.u32 %v55, 7
    %v57 = vsub.s32 %v54, %v56
    %v58 = vrot.slane %v50, %v57
    %v60 = vunpack.c.l.s4 1966171168
    %v61 = vunpack.c.0.s8 %v60
    %v62 = vlaneseq
    %v63 = vshrl.u32 %v62, 7
    %v64 = vsub.s32 %v61, %v63
    %v65 = vrot.slane %v51, %v64
    %v66 = vcombine.high %v58, %v58
    %v67 = vcombine.high %v65, %v65
    %v69 = vunpack.c.l.s4 1966171168
    %v70 = vunpack.c.0.s8 %v69
    %v71 = vlaneseq
    %v72 = vshrl.u32 %v71, 7
    %v73 = vsub.s32 %v70, %v72
    %v74 = vrot.slane %v58, %v73
    %v76 = vunpack.c.l.s4 1966171168
    %v77 = vunpack.c.0.s8 %v76
    %v78 = vlaneseq
    %v79 = vshrl.u32 %v78, 7
    %v80 = vsub.s32 %v77, %v79
    %v81 = vrot.slane %v65, %v80
    %v83 = vunpack.c.l.s4 1966171168
    %v84 = vunpack.c.0.s8 %v83
    %v85 = vlaneseq
    %v86 = vshrl.u32 %v85, 7
    %v87 = vsub.s32 %v84, %v86
    %v88 = vrot.slane %v66, %v87
    %v90 = vunpack.c.l.s4 1966171168
    %v91 = vunpack.c.0.s8 %v90
    %v92 = vlaneseq
    %v93 = vshrl.u32 %v92, 7
    %v94 = vsub.s32 %v91, %v93
    %v95 = vrot.slane %v67, %v94
    %v96 = vcombine.high %v74, %v74
    %v97 = vcombine.high %v81, %v81
    %v98 = vcombine.high %v88, %v88
    %v99 = vcombine.high %v95, %v95
    %v100 = vcombine.low %v41, %v42
    %v101 = vcombine.high %v41, %v42
    %v103 = vunpack.c.l.s4 1966171168
    %v104 = vunpack.c.0.s8 %v103
    %v105 = vlaneseq
    %v106 = vshrl.u32 %v105, 7
    %v107 = vsub.s32 %v104, %v106
    %v108 = vrot.slane %v100, %v107
    %v110 = vunpack.c.l.s4 1966171168
    %v111 = vunpack.c.0.s8 %v110
    %v112 = vlaneseq
    %v113 = vshrl.u32 %v112, 7
    %v114 = vsub.s32 %v111, %v113
    %v115 = vrot.slane %v101, %v114
    %v116 = vcombine.high %v108, %v108
    %v117 = vcombine.high %v115, %v115
    %v119 = vunpack.c.l.s4 1966171168
    %v120 = vunpack.c.0.s8 %v119
    %v121 = vlaneseq
    %v122 = vshrl.u32 %v121, 7
    %v123 = vsub.s32 %v120, %v122
    %v124 = vrot.slane %v108, %v123
    %v126 = vunpack.c.l.s4 1966171168
    %v127 = vunpack.c.0.s8 %v126
    %v128 = vlaneseq
    %v129 = vshrl.u32 %v128, 7
    %v130 = vsub.s32 %v127, %v129
    %v131 = vrot.slane %v115, %v130
    %v133 = vunpack.c.l.s4 1966171168
    %v134 = vunpack.c.0.s8 %v133
    %v135 = vlaneseq
    %v136 = vshrl.u32 %v135, 7
    %v137 = vsub.s32 %v134, %v136
    %v138 = vrot.slane %v116, %v137
    %v140 = vunpack.c.l.s4 1966171168
    %v141 = vunpack.c.0.s8 %v140
    %v142 = vlaneseq
    %v143 = vshrl.u32 %v142, 7
    %v144 = vsub.s32 %v141, %v143
    %v145 = vrot.slane %v117, %v144
    %v146 = vcombine.high %v124, %v124
    %v147 = vcombine.high %v131, %v131
    %v148 = vcombine.high %v138, %v138
    %v149 = vcombine.high %v145, %v145
    %v150 = vcombine.low %v43, %v44
    %v151 = vcombine.high %v43, %v44
    %v153 = vunpack.c.l.s4 1966171168
    %v154 = vunpack.c.0.s8 %v153
    %v155 = vlaneseq
    %v156 = vshrl.u32 %v155, 7
    %v157 = vsub.s32 %v154, %v156
    %v158 = vrot.slane %v150, %v157
    %v160 = vunpack.c.l.s4 1966171168
    %v161 = vunpack.c.0.s8 %v160
    %v162 = vlaneseq
    %v163 = vshrl.u32 %v162, 7
    %v164 = vsub.s32 %v161, %v163
    %v165 = vrot.slane %v151, %v164
    %v166 = vcombine.high %v158, %v158
    %v167 = vcombine.high %v165, %v165
    %v169 = vunpack.c.l.s4 1966171168
    %v170 = vunpack.c.0.s8 %v169
    %v171 = vlaneseq
    %v172 = vshrl.u32 %v171, 7
    %v173 = vsub.s32 %v170, %v172
    %v174 = vrot.slane %v158, %v173
    %v176 = vunpack.c.l.s4 1966171168
    %v177 = vunpack.c.0.s8 %v176
    %v178 = vlaneseq
    %v179 = vshrl.u32 %v178, 7
    %v180 = vsub.s32 %v177, %v179
    %v181 = vrot.slane %v165, %v180
    %v183 = vunpack.c.l.s4 1966171168
    %v184 = vunpack.c.0.s8 %v183
    %v185 = vlaneseq
    %v186 = vshrl.u32 %v185, 7
    %v187 = vsub.s32 %v184, %v186
    %v188 = vrot.slane %v166, %v187
    %v190 = vunpack.c.l.s4 1966171168
    %v191 = vunpack.c.0.s8 %v190
    %v192 = vlaneseq
    %v193 = vshrl.u32 %v192, 7
    %v194 = vsub.s32 %v191, %v193
    %v195 = vrot.slane %v167, %v194
    %v196 = vcombine.high %v174, %v174
    %v197 = vcombine.high %v181, %v181
    %v198 = vcombine.high %v188, %v188
    %v199 = vcombine.high %v195, %v195
    %v200 = vcombine.low %v45, %v46
    %v201 = vcombine.high %v45, %v46
    %v203 = vunpack.c.l.s4 1966171168
    %v204 = vunpack.c.0.s8 %v203
    %v205 = vlaneseq
    %v206 = vshrl.u32 %v205, 7
    %v207 = vsub.s32 %v204, %v206
    %v208 = vrot.slane %v200, %v207
    %v210 = vunpack.c.l.s4 1966171168
    %v211 = vunpack.c.0.s8 %v210
    %v212 = vlaneseq
    %v213 = vshrl.u32 %v212, 7
    %v214 = vsub.s32 %v211, %v213
    %v215 = vrot.slane %v201, %v214
    %v216 = vcombine.high %v208, %v208
    %v217 = vcombine.high %v215, %v215
    %v219 = vunpack.c.l.s4 1966171168
    %v220 = vunpack.c.0.s8 %v219
    %v221 = vlaneseq
    %v222 = vshrl.u32 %v221, 7
    %v223 = vsub.s32 %v220, %v222
    %v224 = vrot.slane %v208, %v223
    %v226 = vunpack.c.l.s4 1966171168
    %v227 = vunpack.c.0.s8 %v226
    %v228 = vlaneseq
    %v229 = vshrl.u32 %v228, 7
    %v230 = vsub.s32 %v227, %v229
    %v231 = vrot.slane %v215, %v230
    %v233 = vunpack.c.l.s4 1966171168
    %v234 = vunpack.c.0.s8 %v233
    %v235 = vlaneseq
    %v236 = vshrl.u32 %v235, 7
    %v237 = vsub.s32 %v234, %v236
    %v238 = vrot.slane %v216, %v237
    %v240 = vunpack.c.l.s4 1966171168
    %v241 = vunpack.c.0.s8 %v240
    %v242 = vlaneseq
    %v243 = vshrl.u32 %v242, 7
    %v244 = vsub.s32 %v241, %v243
    %v245 = vrot.slane %v217, %v244
    %v246 = vcombine.high %v224, %v224
    %v247 = vcombine.high %v231, %v231
    %v248 = vcombine.high %v238, %v238
    %v249 = vcombine.high %v245, %v245
    %v250 = vlaneseq
    %v251 = vshrl.u32 %v250, 7
    %v252 = vsub.s32 0, %v251
    %v253 = vrot.slane %v74, %v252
    %v254 = vlaneseq
    %v255 = vshrl.u32 %v254, 7
    %v256 = vsub.s32 1, %v255
    %v257 = vrot.slane %v74, %v256
    %v258 = vlaneseq
    %v259 = vshrl.u32 %v258, 7
    %v260 = vsub.s32 0, %v259
    %v261 = vrot.slane %v88, %v260
    %v262 = vlaneseq
    %v263 = vshrl.u32 %v262, 7
    %v264 = vsub.s32 1, %v263
    %v265 = vrot.slane %v88, %v264
    %v266 = vlaneseq
    %v267 = vshrl.u32 %v266, 7
    %v268 = vsub.s32 0, %v267
    %v269 = vrot.slane %v96, %v268
    %v270 = vlaneseq
    %v271 = vshrl.u32 %v270, 7
    %v272 = vsub.s32 1, %v271
    %v273 = vrot.slane %v96, %v272
    %v274 = vlaneseq
    %v275 = vshrl.u32 %v274, 7
    %v276 = vsub.s32 0, %v275
    %v277 = vrot.slane %v98, %v276
    %v278 = vlaneseq
    %v279 = vshrl.u32 %v278, 7
    %v280 = vsub.s32 1, %v279
    %v281 = vrot.slane %v98, %v280
    %v282 = vlaneseq
    %v283 = vshrl.u32 %v282, 7
    %v284 = vsub.s32 0, %v283
    %v285 = vrot.slane %v81, %v284
    %v286 = vlaneseq
    %v287 = vshrl.u32 %v286, 7
    %v288 = vsub.s32 1, %v287
    %v289 = vrot.slane %v81, %v288
    %v290 = vlaneseq
    %v291 = vshrl.u32 %v290, 7
    %v292 = vsub.s32 0, %v291
    %v293 = vrot.slane %v95, %v292
    %v294 = vlaneseq
    %v295 = vshrl.u32 %v294, 7
    %v296 = vsub.s32 1, %v295
    %v297 = vrot.slane %v95, %v296
    %v298 = vlaneseq
    %v299 = vshrl.u32 %v298, 7
    %v300 = vsub.s32 0, %v299
    %v301 = vrot.slane %v97, %v300
    %v302 = vlaneseq
    %v303 = vshrl.u32 %v302, 7
    %v304 = vsub.s32 1, %v303
    %v305 = vrot.slane %v97, %v304
    %v306 = vlaneseq
    %v307 = vshrl.u32 %v306, 7
    %v308 = vsub.s32 0, %v307
    %v309 = vrot.slane %v99, %v308
    %v310 = vlaneseq
    %v311 = vshrl.u32 %v310, 7
    %v312 = vsub.s32 1, %v311
    %v313 = vrot.slane %v99, %v312
    %v314 = vlaneseq
    %v315 = vshrl.u32 %v314, 7
    %v316 = vsub.s32 0, %v315
    %v317 = vrot.slane %v124, %v316
    %v318 = vlaneseq
    %v319 = vshrl.u32 %v318, 7
    %v320 = vsub.s32 1, %v319
    %v321 = vrot.slane %v124, %v320
    %v322 = vlaneseq
    %v323 = vshrl.u32 %v322, 7
    %v324 = vsub.s32 0, %v323
    %v325 = vrot.slane %v138, %v324
    %v326 = vlaneseq
    %v327 = vshrl.u32 %v326, 7
    %v328 = vsub.s32 1, %v327
    %v329 = vrot.slane %v138, %v328
    %v330 = vlaneseq
    %v331 = vshrl.u32 %v330, 7
    %v332 = vsub.s32 0, %v331
    %v333 = vrot.slane %v146, %v332
    %v334 = vlaneseq
    %v335 = vshrl.u32 %v334, 7
    %v336 = vsub.s32 1, %v335
    %v337 = vrot.slane %v146, %v336
    %v338 = vlaneseq
    %v339 = vshrl.u32 %v338, 7
    %v340 = vsub.s32 0, %v339
    %v341 = vrot.slane %v148, %v340
    %v342 = vlaneseq
    %v343 = vshrl.u32 %v342, 7
    %v344 = vsub.s32 1, %v343
    %v345 = vrot.slane %v148, %v344
    %v346 = vlaneseq
    %v347 = vshrl.u32 %v346, 7
    %v348 = vsub.s32 0, %v347
    %v349 = vrot.slane %v131, %v348
    %v350 = vlaneseq
    %v351 = vshrl.u32 %v350, 7
    %v352 = vsub.s32 1, %v351
    %v353 = vrot.slane %v131, %v352
    %v354 = vlaneseq
    %v355 = vshrl.u32 %v354, 7
    %v356 = vsub.s32 0, %v355
    %v357 = vrot.slane %v145, %v356
    %v358 = vlaneseq
    %v359 = vshrl.u32 %v358, 7
    %v360 = vsub.s32 1, %v359
    %v361 = vrot.slane %v145, %v360
    %v362 = vlaneseq
    %v363 = vshrl.u32 %v362, 7
    %v364 = vsub.s32 0, %v363
    %v365 = vrot.slane %v147, %v364
    %v366 = vlaneseq
    %v367 = vshrl.u32 %v366, 7
    %v368 = vsub.s32 1, %v367
    %v369 = vrot.slane %v147, %v368
    %v370 = vlaneseq
    %v371 = vshrl.u32 %v370, 7
    %v372 = vsub.s32 0, %v371
    %v373 = vrot.slane %v149, %v372
    %v374 = vlaneseq
    %v375 = vshrl.u32 %v374, 7
    %v376 = vsub.s32 1, %v375
    %v377 = vrot.slane %v149, %v376
    %v378 = vlaneseq
    %v379 = vshrl.u32 %v378, 7
    %v380 = vsub.s32 0, %v379
    %v381 = vrot.slane %v174, %v380
    %v382 = vlaneseq
    %v383 = vshrl.u32 %v382, 7
    %v384 = vsub.s32 1, %v383
    %v385 = vrot.slane %v174, %v384
    %v386 = vlaneseq
    %v387 = vshrl.u32 %v386, 7
    %v388 = vsub.s32 0, %v387
    %v389 = vrot.slane %v188, %v388
    %v390 = vlaneseq
    %v391 = vshrl.u32 %v390, 7
    %v392 = vsub.s32 1, %v391
    %v393 = vrot.slane %v188, %v392
    %v394 = vlaneseq
    %v395 = vshrl.u32 %v394, 7
    %v396 = vsub.s32 0, %v395
    %v397 = vrot.slane %v196, %v396
    %v398 = vlaneseq
    %v399 = vshrl.u32 %v398, 7
    %v400 = vsub.s32 1, %v399
    %v401 = vrot.slane %v196, %v400
    %v402 = vlaneseq
    %v403 = vshrl.u32 %v402, 7
    %v404 = vsub.s32 0, %v403
    %v405 = vrot.slane %v198, %v404
    %v406 = vlaneseq
    %v407 = vshrl.u32 %v406, 7
    %v408 = vsub.s32 1, %v407
    %v409 = vrot.slane %v198, %v408
    %v410 = vlaneseq
    %v411 = vshrl.u32 %v410, 7
    %v412 = vsub.s32 0, %v411
    %v413 = vrot.slane %v181, %v412
    %v414 = vlaneseq
    %v415 = vshrl.u32 %v414, 7
    %v416 = vsub.s32 1, %v415
    %v417 = vrot.slane %v181, %v416
    %v418 = vlaneseq
    %v419 = vshrl.u32 %v418, 7
    %v420 = vsub.s32 0, %v419
    %v421 = vrot.slane %v195, %v420
    %v422 = vlaneseq
    %v423 = vshrl.u32 %v422, 7
    %v424 = vsub.s32 1, %v423
    %v425 = vrot.slane %v195, %v424
    %v426 = vlaneseq
    %v427 = vshrl.u32 %v426, 7
    %v428 = vsub.s32 0, %v427
    %v429 = vrot.slane %v197, %v428
    %v430 = vlaneseq
    %v431 = vshrl.u32 %v430, 7
    %v432 = vsub.s32 1, %v431
    %v433 = vrot.slane %v197, %v432
    %v434 = vlaneseq
    %v435 = vshrl.u32 %v434, 7
    %v436 = vsub.s32 0, %v435
    %v437 = vrot.slane %v199, %v436
    %v438 = vlaneseq
    %v439 = vshrl.u32 %v438, 7
    %v440 = vsub.s32 1, %v439
    %v441 = vrot.slane %v199, %v440
    %v442 = vlaneseq
    %v443 = vshrl.u32 %v442, 7
    %v444 = vsub.s32 0, %v443
    %v445 = vrot.slane %v224, %v444
    %v446 = vlaneseq
    %v447 = vshrl.u32 %v446, 7
    %v448 = vsub.s32 1, %v447
    %v449 = vrot.slane %v224, %v448
    %v450 = vlaneseq
    %v451 = vshrl.u32 %v450, 7
    %v452 = vsub.s32 0, %v451
    %v453 = vrot.slane %v238, %v452
    %v454 = vlaneseq
    %v455 = vshrl.u32 %v454, 7
    %v456 = vsub.s32 1, %v455
    %v457 = vrot.slane %v238, %v456
    %v458 = vlaneseq
    %v459 = vshrl.u32 %v458, 7
    %v460 = vsub.s32 0, %v459
    %v461 = vrot.slane %v246, %v460
    %v462 = vlaneseq
    %v463 = vshrl.u32 %v462, 7
    %v464 = vsub.s32 1, %v463
    %v465 = vrot.slane %v246, %v464
    %v466 = vlaneseq
    %v467 = vshrl.u32 %v466, 7
    %v468 = vsub.s32 0, %v467
    %v469 = vrot.slane %v248, %v468
    %v470 = vlaneseq
    %v471 = vshrl.u32 %v470, 7
    %v472 = vsub.s32 1, %v471
    %v473 = vrot.slane %v248, %v472
    %v474 = vlaneseq
    %v475 = vshrl.u32 %v474, 7
    %v476 = vsub.s32 0, %v475
    %v477 = vrot.slane %v231, %v476
    %v478 = vlaneseq
    %v479 = vshrl.u32 %v478, 7
    %v480 = vsub.s32 1, %v479
    %v481 = vrot.slane %v231, %v480
    %v482 = vlaneseq
    %v483 = vshrl.u32 %v482, 7
    %v484 = vsub.s32 0, %v483
    %v485 = vrot.slane %v245, %v484
    %v486 = vlaneseq
    %v487 = vshrl.u32 %v486, 7
    %v488 = vsub.s32 1, %v487
    %v489 = vrot.slane %v245, %v488
    %v490 = vlaneseq
    %v491 = vshrl.u32 %v490, 7
    %v492 = vsub.s32 0, %v491
    %v493 = vrot.slane %v247, %v492
    %v494 = vlaneseq
    %v495 = vshrl.u32 %v494, 7
    %v496 = vsub.s32 1, %v495
    %v497 = vrot.slane %v247, %v496
    %v498 = vlaneseq
    %v499 = vshrl.u32 %v498, 7
    %v500 = vsub.s32 0, %v499
    %v501 = vrot.slane %v249, %v500
    %v502 = vlaneseq
    %v503 = vshrl.u32 %v502, 7
    %v504 = vsub.s32 1, %v503
    %v505 = vrot.slane %v249, %v504
    %v506 = vshra.s32 %v253, %v49
    %v507 = vshra.s32 %v257, %v49
    %v508 = vshra.s32 %v261, %v49
    %v509 = vshra.s32 %v265, %v49
    %v510 = vshra.s32 %v269, %v49
    %v511 = vshra.s32 %v273, %v49
    %v512 = vshra.s32 %v277, %v49
    %v513 = vshra.s32 %v281, %v49
    %v514 = vshra.s32 %v285, %v49
    %v515 = vshra.s32 %v289, %v49
    %v516 = vshra.s32 %v293, %v49
    %v517 = vshra.s32 %v297, %v49
    %v518 = vshra.s32 %v301, %v49
    %v519 = vshra.s32 %v305, %v49
    %v520 = vshra.s32 %v309, %v49
    %v521 = vshra.s32 %v313, %v49
    %v522 = vshra.s32 %v317, %v49
    %v523 = vshra.s32 %v321, %v49
    %v524 = vshra.s32 %v325, %v49
    %v525 = vshra.s32 %v329, %v49
    %v526 = vshra.s32 %v333, %v49
    %v527 = vshra.s32 %v337, %v49
    %v528 = vshra.s32 %v341, %v49
    %v529 = vshra.s32 %v345, %v49
    %v530 = vshra.s32 %v349, %v49
    %v531 = vshra.s32 %v353, %v49
    %v532 = vshra.s32 %v357, %v49
    %v533 = vshra.s32 %v361, %v49
    %v534 = vshra.s32 %v365, %v49
    %v535 = vshra.s32 %v369, %v49
    %v536 = vshra.s32 %v373, %v49
    %v537 = vshra.s32 %v377, %v49
    %v538 = vshra.s32 %v381, %v49
    %v539 = vshra.s32 %v385, %v49
    %v540 = vshra.s32 %v389, %v49
    %v541 = vshra.s32 %v393, %v49
    %v542 = vshra.s32 %v397, %v49
    %v543 = vshra.s32 %v401, %v49
    %v544 = vshra.s32 %v405, %v49
    %v545 = vshra.s32 %v409, %v49
    %v546 = vshra.s32 %v413, %v49
    %v547 = vshra.s32 %v417, %v49
    %v548 = vshra.s32 %v421, %v49
    %v549 = vshra.s32 %v425, %v49
    %v550 = vshra.s32 %v429, %v49
    %v551 = vshra.s32 %v433, %v49
    %v552 = vshra.s32 %v437, %v49
    %v553 = vshra.s32 %v441, %v49
    %v554 = vshra.s32 %v445, %v49
    %v555 = vshra.s32 %v449, %v49
    %v556 = vshra.s32 %v453, %v49
    %v557 = vshra.s32 %v457, %v49
    %v558 = vshra.s32 %v461, %v49
    %v559 = vshra.s32 %v465, %v49
    %v560 = vshra.s32 %v469, %v49
    %v561 = vshra.s32 %v473, %v49
    %v562 = vshra.s32 %v477, %v49
    %v563 = vshra.s32 %v481, %v49
    %v564 = vshra.s32 %v485, %v49
    %v565 = vshra.s32 %v489, %v49
    %v566 = vshra.s32 %v493, %v49
    %v567 = vshra.s32 %v497, %v49
    %v568 = vshra.s32 %v501, %v49
    %v569 = vshra.s32 %v505, %v49
    %v570 = vand.u32 %v506, 7
    %v571 = vand.u32 %v507, 7
    %v572 = vand.u32 %v508, 7
    %v573 = vand.u32 %v509, 7
    %v574 = vand.u32 %v510, 7
    %v575 = vand.u32 %v511, 7
    %v576 = vand.u32 %v512, 7
    %v577 = vand.u32 %v513, 7
    %v578 = vand.u32 %v514, 7
    %v579 = vand.u32 %v515, 7
    %v580 = vand.u32 %v516, 7
    %v581 = vand.u32 %v517, 7
    %v582 = vand.u32 %v518, 7
    %v583 = vand.u32 %v519, 7
    %v584 = vand.u32 %v520, 7
    %v585 = vand.u32 %v521, 7
    %v586 = vand.u32 %v522, 7
    %v587 = vand.u32 %v523, 7
    %v588 = vand.u32 %v524, 7
    %v589 = vand.u32 %v525, 7
    %v590 = vand.u32 %v526, 7
    %v591 = vand.u32 %v527, 7
    %v592 = vand.u32 %v528, 7
    %v593 = vand.u32 %v529, 7
    %v594 = vand.u32 %v530, 7
    %v595 = vand.u32 %v531, 7
    %v596 = vand.u32 %v532, 7
    %v597 = vand.u32 %v533, 7
    %v598 = vand.u32 %v534, 7
    %v599 = vand.u32 %v535, 7
    %v600 = vand.u32 %v536, 7
    %v601 = vand.u32 %v537, 7
    %v602 = vand.u32 %v538, 7
    %v603 = vand.u32 %v539, 7
    %v604 = vand.u32 %v540, 7
    %v605 = vand.u32 %v541, 7
    %v606 = vand.u32 %v542, 7
    %v607 = vand.u32 %v543, 7
    %v608 = vand.u32 %v544, 7
    %v609 = vand.u32 %v545, 7
    %v610 = vand.u32 %v546, 7
    %v611 = vand.u32 %v547, 7
    %v612 = vand.u32 %v548, 7
    %v613 = vand.u32 %v549, 7
    %v614 = vand.u32 %v550, 7
    %v615 = vand.u32 %v551, 7
    %v616 = vand.u32 %v552, 7
    %v617 = vand.u32 %v553, 7
    %v618 = vand.u32 %v554, 7
    %v619 = vand.u32 %v555, 7
    %v620 = vand.u32 %v556, 7
    %v621 = vand.u32 %v557, 7
    %v622 = vand.u32 %v558, 7
    %v623 = vand.u32 %v559, 7
    %v624 = vand.u32 %v560, 7
    %v625 = vand.u32 %v561, 7
    %v626 = vand.u32 %v562, 7
    %v627 = vand.u32 %v563, 7
    %v628 = vand.u32 %v564, 7
    %v629 = vand.u32 %v565, 7
    %v630 = vand.u32 %v566, 7
    %v631 = vand.u32 %v567, 7
    %v632 = vand.u32 %v568, 7
    %v633 = vand.u32 %v569, 7
    %v634 = vcvt.s32.f32 %v570
    %v635 = vcvt.s32.f32 %v571
    %v636 = vcvt.s32.f32 %v572
    %v637 = vcvt.s32.f32 %v573
    %v638 = vcvt.s32.f32 %v574
    %v639 = vcvt.s32.f32 %v575
    %v640 = vcvt.s32.f32 %v576
    %v641 = vcvt.s32.f32 %v577
    %v642 = vcvt.s32.f32 %v578
    %v643 = vcvt.s32.f32 %v579
    %v644 = vcvt.s32.f32 %v580
    %v645 = vcvt.s32.f32 %v581
    %v646 = vcvt.s32.f32 %v582
    %v647 = vcvt.s32.f32 %v583
    %v648 = vcvt.s32.f32 %v584
    %v649 = vcvt.s32.f32 %v585
    %v650 = vcvt.s32.f32 %v586
    %v651 = vcvt.s32.f32 %v587
    %v652 = vcvt.s32.f32 %v588
    %v653 = vcvt.s32.f32 %v589
    %v654 = vcvt.s32.f32 %v590
    %v655 = vcvt.s32.f32 %v591
    %v656 = vcvt.s32.f32 %v592
    %v657 = vcvt.s32.f32 %v593
    %v658 = vcvt.s32.f32 %v594
    %v659 = vcvt.s32.f32 %v595
    %v660 = vcvt.s32.f32 %v596
    %v661 = vcvt.s32.f32 %v597
    %v662 = vcvt.s32.f32 %v598
    %v663 = vcvt.s32.f32 %v599
    %v664 = vcvt.s32.f32 %v600
    %v665 = vcvt.s32.f32 %v601
    %v666 = vcvt.s32.f32 %v602
    %v667 = vcvt.s32.f32 %v603
    %v668 = vcvt.s32.f32 %v604
    %v669 = vcvt.s32.f32 %v605
    %v670 = vcvt.s32.f32 %v606
    %v671 = vcvt.s32.f32 %v607
    %v672 = vcvt.s32.f32 %v608
    %v673 = vcvt.s32.f32 %v609
    %v674 = vcvt.s32.f32 %v610
    %v675 = vcvt.s32.f32 %v611
    %v676 = vcvt.s32.f32 %v612
    %v677 = vcvt.s32.f32 %v613
    %v678 = vcvt.s32.f32 %v614
    %v679 = vcvt.s32.f32 %v615
    %v680 = vcvt.s32.f32 %v616
    %v681 = vcvt.s32.f32 %v617
    %v682 = vcvt.s32.f32 %v618
    %v683 = vcvt.s32.f32 %v619
    %v684 = vcvt.s32.f32 %v620
    %v685 = vcvt.s32.f32 %v621
    %v686 = vcvt.s32.f32 %v622
    %v687 = vcvt.s32.f32 %v623
    %v688 = vcvt.s32.f32 %v624
    %v689 = vcvt.s32.f32 %v625
    %v690 = vcvt.s32.f32 %v626
    %v691 = vcvt.s32.f32 %v627
    %v692 = vcvt.s32.f32 %v628
    %v693 = vcvt.s32.f32 %v629
    %v694 = vcvt.s32.f32 %v630
    %v695 = vcvt.s32.f32 %v631
    %v696 = vcvt.s32.f32 %v632
    %v697 = vcvt.s32.f32 %v633
    %v698 = vpack.c.bf16 %v634, %v634
    %v699 = vpack.c.bf16 %v635, %v635
    %v700 = vpack.c.bf16 %v636, %v636
    %v701 = vpack.c.bf16 %v637, %v637
    %v702 = vpack.c.bf16 %v638, %v638
    %v703 = vpack.c.bf16 %v639, %v639
    %v704 = vpack.c.bf16 %v640, %v640
    %v705 = vpack.c.bf16 %v641, %v641
    %v706 = vpack.c.bf16 %v642, %v642
    %v707 = vpack.c.bf16 %v643, %v643
    %v708 = vpack.c.bf16 %v644, %v644
    %v709 = vpack.c.bf16 %v645, %v645
    %v710 = vpack.c.bf16 %v646, %v646
    %v711 = vpack.c.bf16 %v647, %v647
    %v712 = vpack.c.bf16 %v648, %v648
    %v713 = vpack.c.bf16 %v649, %v649
    %v714 = vpack.c.bf16 %v650, %v650
    %v715 = vpack.c.bf16 %v651, %v651
    %v716 = vpack.c.bf16 %v652, %v652
    %v717 = vpack.c.bf16 %v653, %v653
    %v718 = vpack.c.bf16 %v654, %v654
    %v719 = vpack.c.bf16 %v655, %v655
    %v720 = vpack.c.bf16 %v656, %v656
    %v721 = vpack.c.bf16 %v657, %v657
    %v722 = vpack.c.bf16 %v658, %v658
    %v723 = vpack.c.bf16 %v659, %v659
    %v724 = vpack.c.bf16 %v660, %v660
    %v725 = vpack.c.bf16 %v661, %v661
    %v726 = vpack.c.bf16 %v662, %v662
    %v727 = vpack.c.bf16 %v663, %v663
    %v728 = vpack.c.bf16 %v664, %v664
    %v729 = vpack.c.bf16 %v665, %v665
    %v730 = vpack.c.bf16 %v666, %v666
    %v731 = vpack.c.bf16 %v667, %v667
    %v732 = vpack.c.bf16 %v668, %v668
    %v733 = vpack.c.bf16 %v669, %v669
    %v734 = vpack.c.bf16 %v670, %v670
    %v735 = vpack.c.bf16 %v671, %v671
    %v736 = vpack.c.bf16 %v672, %v672
    %v737 = vpack.c.bf16 %v673, %v673
    %v738 = vpack.c.bf16 %v674, %v674
    %v739 = vpack.c.bf16 %v675, %v675
    %v740 = vpack.c.bf16 %v676, %v676
    %v741 = vpack.c.bf16 %v677, %v677
    %v742 = vpack.c.bf16 %v678, %v678
    %v743 = vpack.c.bf16 %v679, %v679
    %v744 = vpack.c.bf16 %v680, %v680
    %v745 = vpack.c.bf16 %v681, %v681
    %v746 = vpack.c.bf16 %v682, %v682
    %v747 = vpack.c.bf16 %v683, %v683
    %v748 = vpack.c.bf16 %v684, %v684
    %v749 = vpack.c.bf16 %v685, %v685
    %v750 = vpack.c.bf16 %v686, %v686
    %v751 = vpack.c.bf16 %v687, %v687
    %v752 = vpack.c.bf16 %v688, %v688
    %v753 = vpack.c.bf16 %v689, %v689
    %v754 = vpack.c.bf16 %v690, %v690
    %v755 = vpack.c.bf16 %v691, %v691
    %v756 = vpack.c.bf16 %v692, %v692
    %v757 = vpack.c.bf16 %v693, %v693
    %v758 = vpack.c.bf16 %v694, %v694
    %v759 = vpack.c.bf16 %v695, %v695
    %v760 = vpack.c.bf16 %v696, %v696
    %v761 = vpack.c.bf16 %v697, %v697
    %v762 = vld [vmem:[%s2] sm:$0xf]
    %v765 = vunpack.c.l.s4 1966171168
    %v766 = vunpack.c.0.s8 %v765
    %v767 = vlaneseq
    %v768 = vshrl.u32 %v767, 7
    %v769 = vsub.s32 %v766, %v768
    %v770 = vrot.slane %v762, %v769
    %v771 = vcombine.high %v770, %v770
    %v772 = vunpack.i.l.s16 %v770
    %v773 = vunpack.i.h.s16 %v770
    %v774 = vunpack.i.l.s16 %v771
    %v775 = vunpack.i.h.s16 %v771
    %v776 = vld [vmem:[%s3] sm:$0xf]
    %v779 = vunpack.c.l.s4 1966171168
    %v780 = vunpack.c.0.s8 %v779
    %v781 = vlaneseq
    %v782 = vshrl.u32 %v781, 7
    %v783 = vsub.s32 %v780, %v782
    %v784 = vrot.slane %v776, %v783
    %v785 = vcombine.high %v784, %v784
    %v786 = vunpack.i.l.s16 %v784
    %v787 = vunpack.i.h.s16 %v784
    %v788 = vunpack.i.l.s16 %v785
    %v789 = vunpack.i.h.s16 %v785
    %v790 = vpack.i.b16 %v772, %v772
    %v791 = vpack.i.b16 %v773, %v773
    %v792 = vpack.i.b16 %v774, %v774
    %v793 = vpack.i.b16 %v775, %v775
    %v794 = vlaneseq
    %v795 = vshrl.u32 %v794, 7
    %v796 = vsub.s32 0, %v795
    %v797 = vrot.slane %v790, %v796
    %v798 = vlaneseq
    %v799 = vshrl.u32 %v798, 7
    %v800 = vsub.s32 1, %v799
    %v801 = vrot.slane %v790, %v800
    %v802 = vlaneseq
    %v803 = vshrl.u32 %v802, 7
    %v804 = vsub.s32 0, %v803
    %v805 = vrot.slane %v791, %v804
    %v806 = vlaneseq
    %v807 = vshrl.u32 %v806, 7
    %v808 = vsub.s32 1, %v807
    %v809 = vrot.slane %v791, %v808
    %v810 = vlaneseq
    %v811 = vshrl.u32 %v810, 7
    %v812 = vsub.s32 0, %v811
    %v813 = vrot.slane %v792, %v812
    %v814 = vlaneseq
    %v815 = vshrl.u32 %v814, 7
    %v816 = vsub.s32 1, %v815
    %v817 = vrot.slane %v792, %v816
    %v818 = vlaneseq
    %v819 = vshrl.u32 %v818, 7
    %v820 = vsub.s32 0, %v819
    %v821 = vrot.slane %v793, %v820
    %v822 = vlaneseq
    %v823 = vshrl.u32 %v822, 7
    %v824 = vsub.s32 1, %v823
    %v825 = vrot.slane %v793, %v824
    %v827 = vpack.i.b16 %v797, %v797
    %v829 = vlaneseq
    %v830 = vshrl.u32 %v829, 7
    %v831 = vsub.s32 0, %v830
    %v832 = vrot.slane %v827, %v831
    %v834 = vpack.i.b16 %v801, %v801
    %v836 = vlaneseq
    %v837 = vshrl.u32 %v836, 7
    %v838 = vsub.s32 0, %v837
    %v839 = vrot.slane %v834, %v838
    %v841 = vpack.i.b16 %v805, %v805
    %v843 = vlaneseq
    %v844 = vshrl.u32 %v843, 7
    %v845 = vsub.s32 0, %v844
    %v846 = vrot.slane %v841, %v845
    %v848 = vpack.i.b16 %v809, %v809
    %v850 = vlaneseq
    %v851 = vshrl.u32 %v850, 7
    %v852 = vsub.s32 0, %v851
    %v853 = vrot.slane %v848, %v852
    %v855 = vpack.i.b16 %v813, %v813
    %v857 = vlaneseq
    %v858 = vshrl.u32 %v857, 7
    %v859 = vsub.s32 0, %v858
    %v860 = vrot.slane %v855, %v859
    %v862 = vpack.i.b16 %v817, %v817
    %v864 = vlaneseq
    %v865 = vshrl.u32 %v864, 7
    %v866 = vsub.s32 0, %v865
    %v867 = vrot.slane %v862, %v866
    %v869 = vpack.i.b16 %v821, %v821
    %v871 = vlaneseq
    %v872 = vshrl.u32 %v871, 7
    %v873 = vsub.s32 0, %v872
    %v874 = vrot.slane %v869, %v873
    %v876 = vpack.i.b16 %v825, %v825
    %v878 = vlaneseq
    %v879 = vshrl.u32 %v878, 7
    %v880 = vsub.s32 0, %v879
    %v881 = vrot.slane %v876, %v880
    %v882 = vmul.bf16 %v698, %v832
    %v883 = vmul.bf16 %v699, %v839
    %v884 = vmul.bf16 %v700, %v832
    %v885 = vmul.bf16 %v701, %v839
    %v886 = vmul.bf16 %v702, %v832
    %v887 = vmul.bf16 %v703, %v839
    %v888 = vmul.bf16 %v704, %v832
    %v889 = vmul.bf16 %v705, %v839
    %v890 = vmul.bf16 %v706, %v832
    %v891 = vmul.bf16 %v707, %v839
    %v892 = vmul.bf16 %v708, %v832
    %v893 = vmul.bf16 %v709, %v839
    %v894 = vmul.bf16 %v710, %v832
    %v895 = vmul.bf16 %v711, %v839
    %v896 = vmul.bf16 %v712, %v832
    %v897 = vmul.bf16 %v713, %v839
    %v898 = vmul.bf16 %v714, %v846
    %v899 = vmul.bf16 %v715, %v853
    %v900 = vmul.bf16 %v716, %v846
    %v901 = vmul.bf16 %v717, %v853
    %v902 = vmul.bf16 %v718, %v846
    %v903 = vmul.bf16 %v719, %v853
    %v904 = vmul.bf16 %v720, %v846
    %v905 = vmul.bf16 %v721, %v853
    %v906 = vmul.bf16 %v722, %v846
    %v907 = vmul.bf16 %v723, %v853
    %v908 = vmul.bf16 %v724, %v846
    %v909 = vmul.bf16 %v725, %v853
    %v910 = vmul.bf16 %v726, %v846
    %v911 = vmul.bf16 %v727, %v853
    %v912 = vmul.bf16 %v728, %v846
    %v913 = vmul.bf16 %v729, %v853
    %v914 = vmul.bf16 %v730, %v860
    %v915 = vmul.bf16 %v731, %v867
    %v916 = vmul.bf16 %v732, %v860
    %v917 = vmul.bf16 %v733, %v867
    %v918 = vmul.bf16 %v734, %v860
    %v919 = vmul.bf16 %v735, %v867
    %v920 = vmul.bf16 %v736, %v860
    %v921 = vmul.bf16 %v737, %v867
    %v922 = vmul.bf16 %v738, %v860
    %v923 = vmul.bf16 %v739, %v867
    %v924 = vmul.bf16 %v740, %v860
    %v925 = vmul.bf16 %v741, %v867
    %v926 = vmul.bf16 %v742, %v860
    %v927 = vmul.bf16 %v743, %v867
    %v928 = vmul.bf16 %v744, %v860
    %v929 = vmul.bf16 %v745, %v867
    %v930 = vmul.bf16 %v746, %v874
    %v931 = vmul.bf16 %v747, %v881
    %v932 = vmul.bf16 %v748, %v874
    %v933 = vmul.bf16 %v749, %v881
    %v934 = vmul.bf16 %v750, %v874
    %v935 = vmul.bf16 %v751, %v881
    %v936 = vmul.bf16 %v752, %v874
    %v937 = vmul.bf16 %v753, %v881
    %v938 = vmul.bf16 %v754, %v874
    %v939 = vmul.bf16 %v755, %v881
    %v940 = vmul.bf16 %v756, %v874
    %v941 = vmul.bf16 %v757, %v881
    %v942 = vmul.bf16 %v758, %v874
    %v943 = vmul.bf16 %v759, %v881
    %v944 = vmul.bf16 %v760, %v874
    %v945 = vmul.bf16 %v761, %v881
    %v946 = vpack.i.b16 %v786, %v786
    %v947 = vpack.i.b16 %v787, %v787
    %v948 = vpack.i.b16 %v788, %v788
    %v949 = vpack.i.b16 %v789, %v789
    %v950 = vlaneseq
    %v951 = vshrl.u32 %v950, 7
    %v952 = vsub.s32 0, %v951
    %v953 = vrot.slane %v946, %v952
    %v954 = vlaneseq
    %v955 = vshrl.u32 %v954, 7
    %v956 = vsub.s32 1, %v955
    %v957 = vrot.slane %v946, %v956
    %v958 = vlaneseq
    %v959 = vshrl.u32 %v958, 7
    %v960 = vsub.s32 0, %v959
    %v961 = vrot.slane %v947, %v960
    %v962 = vlaneseq
    %v963 = vshrl.u32 %v962, 7
    %v964 = vsub.s32 1, %v963
    %v965 = vrot.slane %v947, %v964
    %v966 = vlaneseq
    %v967 = vshrl.u32 %v966, 7
    %v968 = vsub.s32 0, %v967
    %v969 = vrot.slane %v948, %v968
    %v970 = vlaneseq
    %v971 = vshrl.u32 %v970, 7
    %v972 = vsub.s32 1, %v971
    %v973 = vrot.slane %v948, %v972
    %v974 = vlaneseq
    %v975 = vshrl.u32 %v974, 7
    %v976 = vsub.s32 0, %v975
    %v977 = vrot.slane %v949, %v976
    %v978 = vlaneseq
    %v979 = vshrl.u32 %v978, 7
    %v980 = vsub.s32 1, %v979
    %v981 = vrot.slane %v949, %v980
    %v983 = vpack.i.b16 %v953, %v953
    %v985 = vlaneseq
    %v986 = vshrl.u32 %v985, 7
    %v987 = vsub.s32 0, %v986
    %v988 = vrot.slane %v983, %v987
    %v990 = vpack.i.b16 %v957, %v957
    %v992 = vlaneseq
    %v993 = vshrl.u32 %v992, 7
    %v994 = vsub.s32 0, %v993
    %v995 = vrot.slane %v990, %v994
    %v997 = vpack.i.b16 %v961, %v961
    %v999 = vlaneseq
    %v1000 = vshrl.u32 %v999, 7
    %v1001 = vsub.s32 0, %v1000
    %v1002 = vrot.slane %v997, %v1001
    %v1004 = vpack.i.b16 %v965, %v965
    %v1006 = vlaneseq
    %v1007 = vshrl.u32 %v1006, 7
    %v1008 = vsub.s32 0, %v1007
    %v1009 = vrot.slane %v1004, %v1008
    %v1011 = vpack.i.b16 %v969, %v969
    %v1013 = vlaneseq
    %v1014 = vshrl.u32 %v1013, 7
    %v1015 = vsub.s32 0, %v1014
    %v1016 = vrot.slane %v1011, %v1015
    %v1018 = vpack.i.b16 %v973, %v973
    %v1020 = vlaneseq
    %v1021 = vshrl.u32 %v1020, 7
    %v1022 = vsub.s32 0, %v1021
    %v1023 = vrot.slane %v1018, %v1022
    %v1025 = vpack.i.b16 %v977, %v977
    %v1027 = vlaneseq
    %v1028 = vshrl.u32 %v1027, 7
    %v1029 = vsub.s32 0, %v1028
    %v1030 = vrot.slane %v1025, %v1029
    %v1032 = vpack.i.b16 %v981, %v981
    %v1034 = vlaneseq
    %v1035 = vshrl.u32 %v1034, 7
    %v1036 = vsub.s32 0, %v1035
    %v1037 = vrot.slane %v1032, %v1036
    %v1038 = vadd.bf16 %v882, %v988
    %v1039 = vadd.bf16 %v883, %v995
    %v1040 = vadd.bf16 %v884, %v988
    %v1041 = vadd.bf16 %v885, %v995
    %v1042 = vadd.bf16 %v886, %v988
    %v1043 = vadd.bf16 %v887, %v995
    %v1044 = vadd.bf16 %v888, %v988
    %v1045 = vadd.bf16 %v889, %v995
    %v1046 = vadd.bf16 %v890, %v988
    %v1047 = vadd.bf16 %v891, %v995
    %v1048 = vadd.bf16 %v892, %v988
    %v1049 = vadd.bf16 %v893, %v995
    %v1050 = vadd.bf16 %v894, %v988
    %v1051 = vadd.bf16 %v895, %v995
    %v1052 = vadd.bf16 %v896, %v988
    %v1053 = vadd.bf16 %v897, %v995
    %v1054 = vadd.bf16 %v898, %v1002
    %v1055 = vadd.bf16 %v899, %v1009
    %v1056 = vadd.bf16 %v900, %v1002
    %v1057 = vadd.bf16 %v901, %v1009
    %v1058 = vadd.bf16 %v902, %v1002
    %v1059 = vadd.bf16 %v903, %v1009
    %v1060 = vadd.bf16 %v904, %v1002
    %v1061 = vadd.bf16 %v905, %v1009
    %v1062 = vadd.bf16 %v906, %v1002
    %v1063 = vadd.bf16 %v907, %v1009
    %v1064 = vadd.bf16 %v908, %v1002
    %v1065 = vadd.bf16 %v909, %v1009
    %v1066 = vadd.bf16 %v910, %v1002
    %v1067 = vadd.bf16 %v911, %v1009
    %v1068 = vadd.bf16 %v912, %v1002
    %v1069 = vadd.bf16 %v913, %v1009
    %v1070 = vadd.bf16 %v914, %v1016
    %v1071 = vadd.bf16 %v915, %v1023
    %v1072 = vadd.bf16 %v916, %v1016
    %v1073 = vadd.bf16 %v917, %v1023
    %v1074 = vadd.bf16 %v918, %v1016
    %v1075 = vadd.bf16 %v919, %v1023
    %v1076 = vadd.bf16 %v920, %v1016
    %v1077 = vadd.bf16 %v921, %v1023
    %v1078 = vadd.bf16 %v922, %v1016
    %v1079 = vadd.bf16 %v923, %v1023
    %v1080 = vadd.bf16 %v924, %v1016
    %v1081 = vadd.bf16 %v925, %v1023
    %v1082 = vadd.bf16 %v926, %v1016
    %v1083 = vadd.bf16 %v927, %v1023
    %v1084 = vadd.bf16 %v928, %v1016
    %v1085 = vadd.bf16 %v929, %v1023
    %v1086 = vadd.bf16 %v930, %v1030
    %v1087 = vadd.bf16 %v931, %v1037
    %v1088 = vadd.bf16 %v932, %v1030
    %v1089 = vadd.bf16 %v933, %v1037
    %v1090 = vadd.bf16 %v934, %v1030
    %v1091 = vadd.bf16 %v935, %v1037
    %v1092 = vadd.bf16 %v936, %v1030
    %v1093 = vadd.bf16 %v937, %v1037
    %v1094 = vadd.bf16 %v938, %v1030
    %v1095 = vadd.bf16 %v939, %v1037
    %v1096 = vadd.bf16 %v940, %v1030
    %v1097 = vadd.bf16 %v941, %v1037
    %v1098 = vadd.bf16 %v942, %v1030
    %v1099 = vadd.bf16 %v943, %v1037
    %v1100 = vadd.bf16 %v944, %v1030
    %v1101 = vadd.bf16 %v945, %v1037
    %v1166 = vunpack.c.l.b16 %v1038
    %v1167 = vunpack.c.l.b16 %v1039
    %v1168 = vunpack.c.l.b16 %v1040
    %v1169 = vunpack.c.l.b16 %v1041
    %v1170 = vunpack.c.l.b16 %v1042
    %v1171 = vunpack.c.l.b16 %v1043
    %v1172 = vunpack.c.l.b16 %v1044
    %v1173 = vunpack.c.l.b16 %v1045
    %v1174 = vunpack.c.l.b16 %v1046
    %v1175 = vunpack.c.l.b16 %v1047
    %v1176 = vunpack.c.l.b16 %v1048
    %v1177 = vunpack.c.l.b16 %v1049
    %v1178 = vunpack.c.l.b16 %v1050
    %v1179 = vunpack.c.l.b16 %v1051
    %v1180 = vunpack.c.l.b16 %v1052
    %v1181 = vunpack.c.l.b16 %v1053
    %v1182 = vunpack.c.l.b16 %v1054
    %v1183 = vunpack.c.l.b16 %v1055
    %v1184 = vunpack.c.l.b16 %v1056
    %v1185 = vunpack.c.l.b16 %v1057
    %v1186 = vunpack.c.l.b16 %v1058
    %v1187 = vunpack.c.l.b16 %v1059
    %v1188 = vunpack.c.l.b16 %v1060
    %v1189 = vunpack.c.l.b16 %v1061
    %v1190 = vunpack.c.l.b16 %v1062
    %v1191 = vunpack.c.l.b16 %v1063
    %v1192 = vunpack.c.l.b16 %v1064
    %v1193 = vunpack.c.l.b16 %v1065
    %v1194 = vunpack.c.l.b16 %v1066
    %v1195 = vunpack.c.l.b16 %v1067
    %v1196 = vunpack.c.l.b16 %v1068
    %v1197 = vunpack.c.l.b16 %v1069
    %v1198 = vunpack.c.l.b16 %v1070
    %v1199 = vunpack.c.l.b16 %v1071
    %v1200 = vunpack.c.l.b16 %v1072
    %v1201 = vunpack.c.l.b16 %v1073
    %v1202 = vunpack.c.l.b16 %v1074
    %v1203 = vunpack.c.l.b16 %v1075
    %v1204 = vunpack.c.l.b16 %v1076
    %v1205 = vunpack.c.l.b16 %v1077
    %v1206 = vunpack.c.l.b16 %v1078
    %v1207 = vunpack.c.l.b16 %v1079
    %v1208 = vunpack.c.l.b16 %v1080
    %v1209 = vunpack.c.l.b16 %v1081
    %v1210 = vunpack.c.l.b16 %v1082
    %v1211 = vunpack.c.l.b16 %v1083
    %v1212 = vunpack.c.l.b16 %v1084
    %v1213 = vunpack.c.l.b16 %v1085
    %v1214 = vunpack.c.l.b16 %v1086
    %v1215 = vunpack.c.l.b16 %v1087
    %v1216 = vunpack.c.l.b16 %v1088
    %v1217 = vunpack.c.l.b16 %v1089
    %v1218 = vunpack.c.l.b16 %v1090
    %v1219 = vunpack.c.l.b16 %v1091
    %v1220 = vunpack.c.l.b16 %v1092
    %v1221 = vunpack.c.l.b16 %v1093
    %v1222 = vunpack.c.l.b16 %v1094
    %v1223 = vunpack.c.l.b16 %v1095
    %v1224 = vunpack.c.l.b16 %v1096
    %v1225 = vunpack.c.l.b16 %v1097
    %v1226 = vunpack.c.l.b16 %v1098
    %v1227 = vunpack.c.l.b16 %v1099
    %v1228 = vunpack.c.l.b16 %v1100
    %v1229 = vunpack.c.l.b16 %v1101
    %v1230 = vld [vmem:[#allocation2] sm:$0xff]
    %v1231 = vld [vmem:[#allocation2 + $0x8] sm:$0xff]
    %v1232 = vld [vmem:[#allocation2 + $0x10] sm:$0xff]
    %v1233 = vld [vmem:[#allocation2 + $0x18] sm:$0xff]
    %v1234 = vld [vmem:[%s0] sm:$0xff]
    %v1235 = vld [vmem:[%s0 + $0x8] sm:$0xff]
    %v1238 = vunpack.c.l.b16 %v1234
    %v1239 = vunpack.c.h.b16 %v1234
    %v1240 = vunpack.c.l.b16 %v1235
    %v1241 = vunpack.c.h.b16 %v1235
    %v1242 = vpack.c.b16 %v1240, %v1238
    %v1243 = vpack.c.b16 %v1241, %v1239
    %v1246 = vpack.c.b16 %v1168, %v1166
    %v1247 = vpack.c.b16 %v1169, %v1167
    %v1248 = vpack.c.b16 %v1172, %v1170
    %v1249 = vpack.c.b16 %v1173, %v1171
    %v1250 = vpack.c.b16 %v1176, %v1174
    %v1251 = vpack.c.b16 %v1177, %v1175
    %v1252 = vpack.c.b16 %v1180, %v1178
    %v1253 = vpack.c.b16 %v1181, %v1179
    %v1254 = vpack.c.b16 %v1184, %v1182
    %v1255 = vpack.c.b16 %v1185, %v1183
    %v1256 = vpack.c.b16 %v1188, %v1186
    %v1257 = vpack.c.b16 %v1189, %v1187
    %v1258 = vpack.c.b16 %v1192, %v1190
    %v1259 = vpack.c.b16 %v1193, %v1191
    %v1260 = vpack.c.b16 %v1196, %v1194
    %v1261 = vpack.c.b16 %v1197, %v1195
    %v1262 = vpack.c.b16 %v1200, %v1198
    %v1263 = vpack.c.b16 %v1201, %v1199
    %v1264 = vpack.c.b16 %v1204, %v1202
    %v1265 = vpack.c.b16 %v1205, %v1203
    %v1266 = vpack.c.b16 %v1208, %v1206
    %v1267 = vpack.c.b16 %v1209, %v1207
    %v1268 = vpack.c.b16 %v1212, %v1210
    %v1269 = vpack.c.b16 %v1213, %v1211
    %v1270 = vpack.c.b16 %v1216, %v1214
    %v1271 = vpack.c.b16 %v1217, %v1215
    %v1272 = vpack.c.b16 %v1220, %v1218
    %v1273 = vpack.c.b16 %v1221, %v1219
    %v1274 = vpack.c.b16 %v1224, %v1222
    %v1275 = vpack.c.b16 %v1225, %v1223
    %v1276 = vpack.c.b16 %v1228, %v1226
    %v1277 = vpack.c.b16 %v1229, %v1227
    %1310 = vmatprep.subr.bf16.mxu0 %v1247
    %1311 = vmatpush1.bf16.msra.mxu0 %v1246
    %1312 = vmatprep.subr.bf16.mxu0 %v1249
    %1313 = vmatpush1.bf16.msra.mxu0 %v1248
    %1314 = vmatprep.subr.bf16.mxu0 %v1251
    %1315 = vmatpush1.bf16.msra.mxu0 %v1250
    %1316 = vmatprep.subr.bf16.mxu0 %v1253
    %1317 = vmatpush1.bf16.msra.mxu0 %v1252
    %1318 = vmatprep.subr.bf16.mxu0 %v1255
    %1319 = vmatpush1.bf16.msra.mxu0 %v1254
    %1320 = vmatprep.subr.bf16.mxu0 %v1257
    %1321 = vmatpush1.bf16.msra.mxu0 %v1256
    %1322 = vmatprep.subr.bf16.mxu0 %v1259
    %1323 = vmatpush1.bf16.msra.mxu0 %v1258
    %1324 = vmatprep.subr.bf16.mxu0 %v1261
    %1325 = vmatpush1.bf16.msra.mxu0 %v1260
    %1326 = vmatprep.subr.bf16.mxu0 %v1263
    %1327 = vmatpush1.bf16.msra.mxu0 %v1262
    %1328 = vmatprep.subr.bf16.mxu0 %v1265
    %1329 = vmatpush1.bf16.msra.mxu0 %v1264
    %1330 = vmatprep.subr.bf16.mxu0 %v1267
    %1331 = vmatpush1.bf16.msra.mxu0 %v1266
    %1332 = vmatprep.subr.bf16.mxu0 %v1269
    %1333 = vmatpush1.bf16.msra.mxu0 %v1268
    %1334 = vmatprep.subr.bf16.mxu0 %v1271
    %1335 = vmatpush1.bf16.msra.mxu0 %v1270
    %1336 = vmatprep.subr.bf16.mxu0 %v1273
    %1337 = vmatpush1.bf16.msra.mxu0 %v1272
    %1338 = vmatprep.subr.bf16.mxu0 %v1275
    %1339 = vmatpush1.bf16.msra.mxu0 %v1274
    %1340 = vmatprep.subr.bf16.mxu0 %v1277
    %1341 = vmatpush1.bf16.msra.mxu0 %v1276
    %1342 = vmatprep.mubr.bf16.mxu0 %v1243
    %1343 = vmatmul.mubr.bf16.gmra.mrb[0].mxu0 %v1242
    %v1344 = vpop.f32.mrb[0].mxu0
    %v1345 = vadd.f32 0.0, %v1344
    %v1346 = vpop.f32.mrb[0].mxu0
    %v1347 = vadd.f32 0.0, %v1346
    %v1348 = vpop.f32.mrb[0].mxu0
    %v1349 = vadd.f32 0.0, %v1348
    %v1350 = vpop.f32.mrb[0].mxu0
    %v1351 = vadd.f32 0.0, %v1350
    %1352 = vdwg.mxu0
    %v1353 = vadd.f32 %v1230, %v1345
    %v1354 = vadd.f32 %v1231, %v1347
    %v1355 = vadd.f32 %v1232, %v1349
    %v1356 = vadd.f32 %v1233, %v1351
    %1357 = vst [vmem:[#allocation2] sm:$0xff] %v1353
    %1358 = vst [vmem:[#allocation2 + $0x8] sm:$0xff] %v1354
    %1359 = vst [vmem:[#allocation2 + $0x10] sm:$0xff] %v1355
    %1360 = vst [vmem:[#allocation2 + $0x18] sm:$0xff] %v1356
    // Predicated region
    $region26: #{qlinear_3bit_with_zero.1} parent=1 // pred_check
      %p1361 = pneg %p31
    $region27: #{qlinear_3bit_with_zero.1} parent=1 // pred_check_branch
      %1363 = sbr.rel (%p1361) target = $region29
    $region28: #{qlinear_3bit_with_zero.1} parent=1 // pred_region
      %v1364 = vld [vmem:[#allocation2] sm:$0xff]
      %v1365 = vld [vmem:[#allocation2 + $0x8] sm:$0xff]
      %v1366 = vld [vmem:[#allocation2 + $0x10] sm:$0xff]
      %v1367 = vld [vmem:[#allocation2 + $0x18] sm:$0xff]
      %v1368 = vpack.c.bf16 %v1366, %v1364
      %v1369 = vpack.c.bf16 %v1367, %v1365
      %v1372 = vunpack.c.l.b16 %v1368
      %v1373 = vunpack.c.l.b16 %v1369
      %v1374 = vunpack.c.h.b16 %v1368
      %v1375 = vunpack.c.h.b16 %v1369
      %v1376 = vpack.c.b16 %v1373, %v1372
      %v1377 = vpack.c.b16 %v1375, %v1374
      %1380 = vst [vmem:[%s4] sm:$0xff] %v1376
      %1381 = vst [vmem:[%s4 + $0x8] sm:$0xff] %v1377
    $region29: #{qlinear_3bit_with_zero.1} parent=1 // pred_fallthru
      _
    // Predicated region
    $region30: #{qlinear_3bit_with_zero.1} parent=1 // pred_check
      _
    $region31: #{qlinear_3bit_with_zero.1} parent=1 // pred_check_branch
      %1383 = sbr.rel (0) target = $region33
    $region32: #{qlinear_3bit_with_zero.1} parent=1 // pred_region
      _
    $region33: #{qlinear_3bit_with_zero.1} parent=1 // pred_fallthru
      _
    // Predicated region
    $region34: #{qlinear_3bit_with_zero.1} parent=1 // pred_check
      _
    $region35: #{qlinear_3bit_with_zero.1} parent=1 // pred_check_branch
      %1385 = sbr.rel (0) target = $region37
    $region36: #{qlinear_3bit_with_zero.1} parent=1 // pred_region
      _
    $region37: #{qlinear_3bit_with_zero.1} parent=1 // pred_fallthru
      _
    %1386 = vsyncpa [#allocation4], 1

</llo_original>
